<compile_context>
chip_gen: v7x
topology: tpu7x:2x2x1
jax: 0.10.0
libtpu: 0.0.40
codegen_flags: <defaults>
</compile_context>

<pallas_src>
import jax
import jax.numpy as jnp
from jax.experimental import pallas as pl
from jax.experimental.pallas import tpu as pltpu

LANES = 128
CHUNK_ROWS = 64                 # rows per inner-loop step (f32: 8 vregs / operand)
TILE_BYTES_TARGET = 2 << 20     # ~2 MiB per input block (v5e-safe with 2x2 buffers)


def _cdiv(a, b):
    return -(-a // b)


def _round_up(a, b):
    return _cdiv(a, b) * b


def _num_tensorcores():
    """Partial-accumulator sets (one per TensorCore sharing this Pallas grid)."""
    try:
        kind = jax.devices()[0].device_kind.lower()
    except Exception:
        return 2  # always-correct fallback
    single_core = ("v2", "v3", "v5e", "v5 lite", "v5lite", "v6e", "v6 lite", "v6lite", "lite")
    if any(s in kind for s in single_core):
        return 1
    return 2  # v4 / v5p / v7x megacore


def _make_rmse_kernel(rows_total, tile_rows, chunk_rows, nblocks, bpc):
    n_chunks = tile_rows // chunk_rows
    groups = chunk_rows // 8

    def _accum(pred_ref, tgt_ref, row0, masked):
        # Chunked accumulation: intermediates stay in vregs; the (8,128)
        # carries are the only values that persist across chunks.
        def body(ci, carry):
            acc, cnt = carry
            r0 = pl.multiple_of(ci * chunk_rows, chunk_rows)
            t = tgt_ref[pl.ds(r0, chunk_rows), :].astype(jnp.float32)
            p = pred_ref[pl.ds(r0, chunk_rows), :].astype(jnp.float32)
            valid = t > 0.0
            if masked:
                rid = (jax.lax.broadcasted_iota(jnp.int32, (chunk_rows, LANES), 0)
                       + row0 + r0)
                valid = jnp.logical_and(valid, rid < rows_total)
            diff = jnp.where(valid, t - p, 0.0)   # |t-p|**2 == (t-p)**2 for floats
            acc = acc + (diff * diff).reshape(groups, 8, LANES).sum(axis=0)
            cnt = cnt + valid.astype(jnp.int32).reshape(groups, 8, LANES).sum(axis=0)
            return acc, cnt

        init = (jnp.zeros((8, LANES), jnp.float32),
                jnp.zeros((8, LANES), jnp.int32))
        return jax.lax.fori_loop(0, n_chunks, body, init)

    def kernel(pred_ref, tgt_ref, sum_ref, cnt_ref):
        c = pl.program_id(0)
        i = pl.program_id(1)

        # Per-core accumulators live in the resident (8,128) output blocks.
        @pl.when(i == 0)
        def _():
            sum_ref[...] = jnp.zeros_like(sum_ref)
            cnt_ref[...] = jnp.zeros_like(cnt_ref)

        # UNCLAMPED block index (the input DMA uses the clamped one).  Blocks
        # with blk >= nblocks are the clamped duplicates -> skipped entirely,
        # so they can never double-count.
        blk = c * bpc + i
        row0 = blk * tile_rows
        is_real = blk < nblocks
        is_full = row0 + tile_rows <= rows_total

        # Fast path: fully in-bounds block, no bounds masking at all.
        @pl.when(jnp.logical_and(is_real, is_full))
        def _():
            acc, cnt = _accum(pred_ref, tgt_ref, row0, masked=False)
            sum_ref[...] += acc
            cnt_ref[...] += cnt

        # Masked path: the (single) partial last block; garbage rows past
        # rows_total are zeroed by the iota row mask.
        @pl.when(jnp.logical_and(is_real, jnp.logical_not(is_full)))
        def _():
            acc, cnt = _accum(pred_ref, tgt_ref, row0, masked=True)
            sum_ref[...] += acc
            cnt_ref[...] += cnt

    return kernel


def rmse_loss(pred, target, unsqueeze=True):
    """Pallas implementation of RMSE.forward(pred, target, unsqueeze)."""
    if unsqueeze:
        target = target[:, None]  # unsqueeze(1): (N,H,W) -> (N,1,H,W)

    if pred.shape != target.shape:
        # Glue (not the hot path): bilinear resize of pred to target's H,W.
        # TODO(synk): jax.image.resize bilinear boundary handling may differ
        # slightly from torch F.upsample(mode='bilinear'); acceptable here.
        N, C = pred.shape[:2]
        H, W = target.shape[-2:]
        pred = jax.image.resize(pred, (N, C, H, W), method="bilinear")

    # Flatten to a lane-dense [rows, 128] slab; keep dtypes (upcast in-kernel).
    p_flat = pred.reshape(-1)
    t_flat = target.reshape(-1)
    n = p_flat.shape[0]

    # No padding when n is lane-aligned (the common case for image tensors):
    # rows that aren't a multiple of 8 / of tile_rows are masked in-kernel.
    rem = n % LANES
    if rem:
        # TODO(synk): ragged tail (< 128 elems) still costs a full-array pad copy.
        pad = LANES - rem
        p_flat = jnp.pad(p_flat, (0, pad))
        t_flat = jnp.pad(t_flat, (0, pad))

    rows = p_flat.shape[0] // LANES
    p2 = p_flat.reshape(rows, LANES)
    t2 = t_flat.reshape(rows, LANES)

    # Block size from a byte budget (~2 MiB per input block).
    itemsize = max(jnp.dtype(pred.dtype).itemsize, jnp.dtype(target.dtype).itemsize)
    budget_rows = max(CHUNK_ROWS,
                      (TILE_BYTES_TARGET // (LANES * itemsize)) // CHUNK_ROWS * CHUNK_ROWS)
    if rows >= CHUNK_ROWS:
        tile_rows = min(budget_rows, _round_up(rows, CHUNK_ROWS))
        chunk_rows = CHUNK_ROWS
    else:
        tile_rows = _round_up(rows, 8)
        chunk_rows = tile_rows

    nblocks = _cdiv(rows, tile_rows)
    num_cores = min(_num_tensorcores(), nblocks)
    bpc = _cdiv(nblocks, num_cores)  # blocks per core

    def in_map(c, i):
        # Clamp so the DMA never targets a block fully outside the slab; the
        # duplicate block's compute is skipped in-kernel (blk >= nblocks).
        return (jnp.minimum(c * bpc + i, nblocks - 1), 0)

    sum_part, cnt_part = pl.pallas_call(
        _make_rmse_kernel(rows, tile_rows, chunk_rows, nblocks, bpc),
        out_shape=(
            jax.ShapeDtypeStruct((num_cores * 8, LANES), jnp.float32),
            jax.ShapeDtypeStruct((num_cores * 8, LANES), jnp.int32),
        ),
        grid=(num_cores, bpc),
        in_specs=[
            pl.BlockSpec((tile_rows, LANES), in_map),
            pl.BlockSpec((tile_rows, LANES), in_map),
        ],
        out_specs=(
            pl.BlockSpec((8, LANES), lambda c, i: (c, 0)),
            pl.BlockSpec((8, LANES), lambda c, i: (c, 0)),
        ),
        compiler_params=pltpu.CompilerParams(
            dimension_semantics=("parallel", "arbitrary"),
        ),
    )(p2, t2)

    total_sq = jnp.sum(sum_part)
    # int32 partial counts: exact up to 2^31 valid pixels.
    total_cnt = jnp.sum(cnt_part).astype(jnp.float32)
    # total_cnt == 0 -> NaN, matching torch.mean over an empty selection.
    return jnp.sqrt(total_sq / total_cnt)


def _ref_rmse(pred, target, unsqueeze=True):
    if unsqueeze:
        target = target[:, None]
    if pred.shape != target.shape:
        N, C = pred.shape[:2]
        H, W = target.shape[-2:]
        pred = jax.image.resize(pred, (N, C, H, W), method="bilinear")
    mask = target > 0
    diff = jnp.where(mask, target - pred, 0.0).astype(jnp.float32)
    return jnp.sqrt(jnp.sum(diff * diff) / jnp.sum(mask.astype(jnp.float32)))


if __name__ == "__main__":
    key = jax.random.PRNGKey(0)

    # (N, C, H, W) for pred; target is (N, H, W) and gets unsqueezed.
    shapes = [
        (2, 1, 16, 16),    # lane-aligned, single partial block (masked path)
        (2, 1, 40, 48),    # rows not a multiple of 8, no padding needed
        (1, 1, 13, 10),    # ragged tail (n % 128 != 0) -> pad path
        (2, 1, 64, 64),    # exact full block -> mask-free fast path
        (2, 1, 640, 480),  # multi-block: fast path blocks + masked last block
    ]
    cases = []
    for (N, C, H, W) in shapes:
        key, k1, k2 = jax.random.split(key, 3)
        pred = jax.random.uniform(k1, (N, C, H, W), dtype=jnp.float32)
        target = jax.random.uniform(k2, (N, H, W), dtype=jnp.float32,
                                    minval=-0.5, maxval=2.0)
        cases.append((pred, target))

    # Shape-mismatch case exercising the bilinear-resize glue path.
    key, k1, k2 = jax.random.split(key, 3)
    cases.append((jax.random.uniform(k1, (2, 1, 8, 8), dtype=jnp.float32),
                  jax.random.uniform(k2, (2, 16, 16), dtype=jnp.float32,
                                     minval=-0.5, maxval=2.0)))

    for pred, target in cases:
        loss = rmse_loss(pred, target, unsqueeze=True)
        jax.block_until_ready(loss)
        ref = _ref_rmse(pred, target, unsqueeze=True)
        assert jnp.allclose(loss, ref, rtol=1e-5, atol=1e-6), (pred.shape, loss, ref)

    print("KERNEL_OK")
</pallas_src>

<mosaic_0001>
module attributes {stable_mosaic.version = 11 : i64} {
  func.func @kernel(%arg0: i32, %arg1: i32, %arg2: memref<8x128xf32, #tpu.memory_space<vmem>>, %arg3: memref<8x128xf32, #tpu.memory_space<vmem>>, %arg4: memref<8x128xf32, #tpu.memory_space<vmem>>, %arg5: memref<8x128xi32, #tpu.memory_space<vmem>>) attributes {dimension_semantics = [#tpu.dimension_semantics<parallel>, #tpu.dimension_semantics<arbitrary>], iteration_bounds = array<i64: 1, 1>, scalar_prefetch = 0 : i64, scratch_operands = 0 : i64, tpu.core_type = #tpu.core_type<tc>, window_params = [{transform_indices = @transform_0, window_bounds = array<i64: 8, 128>}, {transform_indices = @transform_1, window_bounds = array<i64: 8, 128>}, {transform_indices = @transform_2, window_bounds = array<i64: 8, 128>}, {transform_indices = @transform_3, window_bounds = array<i64: 8, 128>}]} {
    %c0_i32 = arith.constant 0 : i32
    %0 = arith.cmpi eq, %arg1, %c0_i32 : i32
    %1 = arith.extui %0 : i1 to i32
    %c0_i32_0 = arith.constant 0 : i32
    %2 = arith.cmpi ne, %1, %c0_i32_0 : i32
    scf.if %2 {
      %cst = arith.constant 0.000000e+00 : f32
      %16 = vector.broadcast %cst : f32 to vector<8x128xf32>
      %c0 = arith.constant 0 : index
      %c0_5 = arith.constant 0 : index
      %17 = vector.load %arg4[%c0, %c0_5] : memref<8x128xf32, #tpu.memory_space<vmem>>, vector<8x128xf32>
      tpu.vector_store %arg4[%c0, %c0_5], %16 {strides = array<i32>} : memref<8x128xf32, #tpu.memory_space<vmem>>, vector<8x128xf32>,
      %c0_i32_6 = arith.constant 0 : i32
      %18 = vector.broadcast %c0_i32_6 : i32 to vector<8x128xi32>
      %c0_7 = arith.constant 0 : index
      %c0_8 = arith.constant 0 : index
      %19 = vector.load %arg5[%c0_7, %c0_8] : memref<8x128xi32, #tpu.memory_space<vmem>>, vector<8x128xi32>
      tpu.vector_store %arg5[%c0_7, %c0_8], %18 {strides = array<i32>} : memref<8x128xi32, #tpu.memory_space<vmem>>, vector<8x128xi32>,
    } else {
    }
    %c1_i32 = arith.constant 1 : i32
    %3 = arith.muli %arg0, %c1_i32 : i32
    %4 = arith.addi %3, %arg1 : i32
    %c8_i32 = arith.constant 8 : i32
    %5 = arith.muli %4, %c8_i32 : i32
    %c1_i32_1 = arith.constant 1 : i32
    %6 = arith.cmpi slt, %4, %c1_i32_1 : i32
    %c8_i32_2 = arith.constant 8 : i32
    %7 = arith.addi %5, %c8_i32_2 : i32
    %c4_i32 = arith.constant 4 : i32
    %8 = arith.cmpi sle, %7, %c4_i32 : i32
    %9 = arith.andi %6, %8 : i1
    %10 = arith.extui %9 : i1 to i32
    %c0_i32_3 = arith.constant 0 : i32
    %11 = arith.cmpi ne, %10, %c0_i32_3 : i32
    scf.if %11 {
      %cst = arith.constant 0.000000e+00 : f32
      %16 = vector.broadcast %cst : f32 to vector<8x128xf32>
      %c0_i32_5 = arith.constant 0 : i32
      %17 = vector.broadcast %c0_i32_5 : i32 to vector<8x128xi32>
      %c0_i32_6 = arith.constant 0 : i32
      %c8_i32_7 = arith.constant 8 : i32
      %18 = arith.muli %c0_i32_6, %c8_i32_7 : i32
      %19 = tpu.assume_multiple %18, 8 : i32
      %20 = arith.index_cast %19 : i32 to index
      %c0 = arith.constant 0 : index
      %21 = vector.load %arg3[%20, %c0] : memref<8x128xf32, #tpu.memory_space<vmem>>, vector<8x128xf32>
      %22 = arith.index_cast %19 : i32 to index
      %c0_8 = arith.constant 0 : index
      %23 = vector.load %arg2[%22, %c0_8] : memref<8x128xf32, #tpu.memory_space<vmem>>, vector<8x128xf32>
      %cst_9 = arith.constant 0.000000e+00 : f32
      %24 = vector.broadcast %cst_9 : f32 to vector<8x128xf32>
      %25 = arith.cmpf ogt, %21, %24 : vector<8x128xf32>
      %26 = arith.subf %21, %23 : vector<8x128xf32>
      %cst_10 = arith.constant 0.000000e+00 : f32
      %27 = vector.broadcast %cst_10 : f32 to vector<8x128xf32>
      %28 = arith.select %25, %26, %27 : vector<8x128xi1>, vector<8x128xf32>
      %29 = arith.mulf %28, %28 : vector<8x128xf32>
      %30 = vector.shape_cast %29 : vector<8x128xf32> to vector<1x8x128xf32>
      %cst_11 = arith.constant dense<0.000000e+00> : vector<8x128xf32>
      %31 = vector.multi_reduction <add>, %30, %cst_11 [0] : vector<1x8x128xf32> to vector<8x128xf32>
      %32 = arith.addf %16, %31 : vector<8x128xf32>
      %33 = arith.extui %25 : vector<8x128xi1> to vector<8x128xi32>
      %34 = vector.shape_cast %33 : vector<8x128xi32> to vector<1x8x128xi32>
      %cst_12 = arith.constant dense<0> : vector<8x128xi32>
      %35 = vector.multi_reduction <add>, %34, %cst_12 [0] : vector<1x8x128xi32> to vector<8x128xi32>
      %36 = arith.addi %17, %35 : vector<8x128xi32>
      %c1_i32_13 = arith.constant 1 : i32
      %c0_14 = arith.constant 0 : index
      %c0_15 = arith.constant 0 : index
      %37 = vector.load %arg4[%c0_14, %c0_15] : memref<8x128xf32, #tpu.memory_space<vmem>>, vector<8x128xf32>
      %38 = arith.addf %37, %32 : vector<8x128xf32>
      %c0_16 = arith.constant 0 : index
      %c0_17 = arith.constant 0 : index
      %39 = vector.load %arg4[%c0_16, %c0_17] : memref<8x128xf32, #tpu.memory_space<vmem>>, vector<8x128xf32>
      tpu.vector_store %arg4[%c0_16, %c0_17], %38 {strides = array<i32>} : memref<8x128xf32, #tpu.memory_space<vmem>>, vector<8x128xf32>,
      %c0_18 = arith.constant 0 : index
      %c0_19 = arith.constant 0 : index
      %40 = vector.load %arg5[%c0_18, %c0_19] : memref<8x128xi32, #tpu.memory_space<vmem>>, vector<8x128xi32>
      %41 = arith.addi %40, %36 : vector<8x128xi32>
      %c0_20 = arith.constant 0 : index
      %c0_21 = arith.constant 0 : index
      %42 = vector.load %arg5[%c0_20, %c0_21] : memref<8x128xi32, #tpu.memory_space<vmem>>, vector<8x128xi32>
      tpu.vector_store %arg5[%c0_20, %c0_21], %41 {strides = array<i32>} : memref<8x128xi32, #tpu.memory_space<vmem>>, vector<8x128xi32>,
    } else {
    }
    %true = arith.constant true
    %12 = arith.xori %8, %true : i1
    %13 = arith.andi %6, %12 : i1
    %14 = arith.extui %13 : i1 to i32
    %c0_i32_4 = arith.constant 0 : i32
    %15 = arith.cmpi ne, %14, %c0_i32_4 : i32
    scf.if %15 {
      %cst = arith.constant 0.000000e+00 : f32
      %16 = vector.broadcast %cst : f32 to vector<8x128xf32>
      %c0_i32_5 = arith.constant 0 : i32
      %17 = vector.broadcast %c0_i32_5 : i32 to vector<8x128xi32>
      %c0_i32_6 = arith.constant 0 : i32
      %c8_i32_7 = arith.constant 8 : i32
      %18 = arith.muli %c0_i32_6, %c8_i32_7 : i32
      %19 = tpu.assume_multiple %18, 8 : i32
      %20 = arith.index_cast %19 : i32 to index
      %c0 = arith.constant 0 : index
      %21 = vector.load %arg3[%20, %c0] : memref<8x128xf32, #tpu.memory_space<vmem>>, vector<8x128xf32>
      %22 = arith.index_cast %19 : i32 to index
      %c0_8 = arith.constant 0 : index
      %23 = vector.load %arg2[%22, %c0_8] : memref<8x128xf32, #tpu.memory_space<vmem>>, vector<8x128xf32>
      %cst_9 = arith.constant 0.000000e+00 : f32
      %24 = vector.broadcast %cst_9 : f32 to vector<8x128xf32>
      %25 = arith.cmpf ogt, %21, %24 : vector<8x128xf32>
      %26 = tpu.iota {dimensions = array<i32: 0>} : vector<8x128xi32>
      %27 = vector.broadcast %5 : i32 to vector<8x128xi32>
      %28 = arith.addi %26, %27 : vector<8x128xi32>
      %29 = vector.broadcast %19 : i32 to vector<8x128xi32>
      %30 = arith.addi %28, %29 : vector<8x128xi32>
      %c4_i32_10 = arith.constant 4 : i32
      %31 = vector.broadcast %c4_i32_10 : i32 to vector<8x128xi32>
      %32 = arith.cmpi slt, %30, %31 : vector<8x128xi32>
      %33 = arith.andi %25, %32 : vector<8x128xi1>
      %34 = arith.subf %21, %23 : vector<8x128xf32>
      %cst_11 = arith.constant 0.000000e+00 : f32
      %35 = vector.broadcast %cst_11 : f32 to vector<8x128xf32>
      %36 = arith.select %33, %34, %35 : vector<8x128xi1>, vector<8x128xf32>
      %37 = arith.mulf %36, %36 : vector<8x128xf32>
      %38 = vector.shape_cast %37 : vector<8x128xf32> to vector<1x8x128xf32>
      %cst_12 = arith.constant dense<0.000000e+00> : vector<8x128xf32>
      %39 = vector.multi_reduction <add>, %38, %cst_12 [0] : vector<1x8x128xf32> to vector<8x128xf32>
      %40 = arith.addf %16, %39 : vector<8x128xf32>
      %41 = arith.extui %33 : vector<8x128xi1> to vector<8x128xi32>
      %42 = vector.shape_cast %41 : vector<8x128xi32> to vector<1x8x128xi32>
      %cst_13 = arith.constant dense<0> : vector<8x128xi32>
      %43 = vector.multi_reduction <add>, %42, %cst_13 [0] : vector<1x8x128xi32> to vector<8x128xi32>
      %44 = arith.addi %17, %43 : vector<8x128xi32>
      %c1_i32_14 = arith.constant 1 : i32
      %c0_15 = arith.constant 0 : index
      %c0_16 = arith.constant 0 : index
      %45 = vector.load %arg4[%c0_15, %c0_16] : memref<8x128xf32, #tpu.memory_space<vmem>>, vector<8x128xf32>
      %46 = arith.addf %45, %40 : vector<8x128xf32>
      %c0_17 = arith.constant 0 : index
      %c0_18 = arith.constant 0 : index
      %47 = vector.load %arg4[%c0_17, %c0_18] : memref<8x128xf32, #tpu.memory_space<vmem>>, vector<8x128xf32>
      tpu.vector_store %arg4[%c0_17, %c0_18], %46 {strides = array<i32>} : memref<8x128xf32, #tpu.memory_space<vmem>>, vector<8x128xf32>,
      %c0_19 = arith.constant 0 : index
      %c0_20 = arith.constant 0 : index
      %48 = vector.load %arg5[%c0_19, %c0_20] : memref<8x128xi32, #tpu.memory_space<vmem>>, vector<8x128xi32>
      %49 = arith.addi %48, %44 : vector<8x128xi32>
      %c0_21 = arith.constant 0 : index
      %c0_22 = arith.constant 0 : index
      %50 = vector.load %arg5[%c0_21, %c0_22] : memref<8x128xi32, #tpu.memory_space<vmem>>, vector<8x128xi32>
      tpu.vector_store %arg5[%c0_21, %c0_22], %49 {strides = array<i32>} : memref<8x128xi32, #tpu.memory_space<vmem>>, vector<8x128xi32>,
    } else {
    }
    return
  }
  func.func @transform_0(%arg0: i32, %arg1: i32) -> (i32, i32) {
    %c1_i32 = arith.constant 1 : i32
    %0 = arith.muli %arg0, %c1_i32 : i32
    %1 = arith.addi %0, %arg1 : i32
    %c0_i32 = arith.constant 0 : i32
    %2 = arith.minsi %1, %c0_i32 : i32
    %c0_i32_0 = arith.constant 0 : i32
    %c0_i32_1 = arith.constant 0 : i32
    return %2, %c0_i32_0 : i32, i32
  }
  func.func @transform_1(%arg0: i32, %arg1: i32) -> (i32, i32) {
    %c1_i32 = arith.constant 1 : i32
    %0 = arith.muli %arg0, %c1_i32 : i32
    %1 = arith.addi %0, %arg1 : i32
    %c0_i32 = arith.constant 0 : i32
    %2 = arith.minsi %1, %c0_i32 : i32
    %c0_i32_0 = arith.constant 0 : i32
    %c0_i32_1 = arith.constant 0 : i32
    return %2, %c0_i32_0 : i32, i32
  }
  func.func @transform_2(%arg0: i32, %arg1: i32) -> (i32, i32) {
    %c0_i32 = arith.constant 0 : i32
    %c0_i32_0 = arith.constant 0 : i32
    return %arg0, %c0_i32 : i32, i32
  }
  func.func @transform_3(%arg0: i32, %arg1: i32) -> (i32, i32) {
    %c0_i32 = arith.constant 0 : i32
    %c0_i32_0 = arith.constant 0 : i32
    return %arg0, %c0_i32 : i32, i32
  }
}

</mosaic_0001>

<llo_original>
// kernel: tpu_custom_call.1
$region0: #{tpu_custom_call.1}
  #allocation0 [shape = 'u32[]', space=smem, size = 0x4, offset = 0x4, fixed_abs, tag = 'smem constant byte address 0x4 - core index']
  #allocation1 [shape = 'u32[144,128]{1,0:T(1,128)}', space=vmem, size = 0x12000, scoped, tag = 'internal scratch']
  %s0 = inlined_call_operand.hbm [shape: f32[4,128], index: 0, kind: input, shape index: {}]
  %s1 = inlined_call_operand.hbm [shape: f32[4,128], index: 1, kind: input, shape index: {}]
  %s2 = inlined_call_operand.hbm [shape: f32[8,128], index: 2, kind: output, shape index: {0}]
  %s3 = inlined_call_operand.hbm [shape: s32[8,128], index: 3, kind: output, shape index: {1}]
  %4 = xla_tuple %s2, %s3
  %s5 = sld [smem:[#allocation0]]
  $region46: #{tpu_custom_call.1} parent=0
    _
  %s7 = ssub.s32 1, %s5
  %s8 = scalar_select 0, %s7, %s5
  $region1: #{tpu_custom_call.1} parent=0
    #allocation2 [shape = 'u8[4096]{0}', space=vmem, size = 0x1000, scoped, tag = 'input window, operand 0, single buffered']
    #allocation3 [shape = 's32[1]{0}', space=sflag, size = 0x4, scoped, tag = 'scoped memory for tpu_custom_call.1']
    #allocation4 [shape = 's32[1]{0}', space=sflag, size = 0x4, scoped, tag = 'scoped memory for tpu_custom_call.1']
    #allocation5 [shape = 'u8[4096]{0}', space=vmem, size = 0x1000, scoped, tag = 'input window, operand 1, single buffered']
    #allocation6 [shape = 's32[1]{0}', space=sflag, size = 0x4, scoped, tag = 'scoped memory for tpu_custom_call.1']
    #allocation7 [shape = 'u8[4096]{0}', space=vmem, size = 0x1000, scoped, tag = 'output window, operand 0, single buffered']
    #allocation8 [shape = 'u8[4096]{0}', space=vmem, size = 0x1000, scoped, tag = 'output window, operand 1, single buffered']
    #allocation9 [shape = 's32[1]{0}', space=sflag, size = 0x4, scoped, tag = 'scoped memory for tpu_custom_call.1']
    %9 = vsyncpa [#allocation3], 0
    %10 = vsyncpa [#allocation6], 0
    %11 = vsyncpa [#allocation4], 0
    %12 = vsyncpa [#allocation9], 0
    // Predicated region
    $region2: #{tpu_custom_call.1} parent=1 // pred_check
      _
    $region3: #{tpu_custom_call.1} parent=1 // pred_check_branch
      %14 = sbr.rel (0) target = $region5
    $region4: #{tpu_custom_call.1} parent=1 // pred_region
      %s15 = sadd.s32 0, 0
      %p16 = scmp.lt.s32.totalorder %s15, 0
      %s17 = scalar_select %p16, %s15, 0
      %s18 = smul.u32 2, %s17
      %s19 = ssub.s32 1, %s18
      %s20 = smul.u32 64, %s19
      %s22 = ssub.s32 128, %s20
      %23 = vsyncadd [#allocation3], %s22
      %p24 = scmp.ne.s32.totalorder 0, %s20
      %s25 = smul.addr %s18, 64
      %s26 = scalar_lea.hbm %s0, %s25
      %s27 = smul.u32 4, %s19
      %s28 = sshll.u32 [#allocation2], 4
      %s29 = int_to_ptr.vmem [resolvable:$true] %s28
      %s30 = sshll.u32 %s27, 4
      %34 = dma.hbm_to_vmem [thread:$0]  (%p24), %s26, %s30, %s29, [#allocation3], 64, 64, 4
    $region5: #{tpu_custom_call.1} parent=1 // pred_fallthru
      _
    // Predicated region
    $region6: #{tpu_custom_call.1} parent=1 // pred_check
      _
    $region7: #{tpu_custom_call.1} parent=1 // pred_check_branch
      %36 = sbr.rel (0) target = $region9
    $region8: #{tpu_custom_call.1} parent=1 // pred_region
      %s37 = sadd.s32 0, 0
      %p38 = scmp.lt.s32.totalorder %s37, 0
      %s39 = scalar_select %p38, %s37, 0
      %s40 = smul.u32 2, %s39
      %s41 = ssub.s32 1, %s40
      %s42 = smul.u32 64, %s41
      %s44 = ssub.s32 128, %s42
      %45 = vsyncadd [#allocation6], %s44
      %p46 = scmp.ne.s32.totalorder 0, %s42
      %s47 = smul.addr %s40, 64
      %s48 = scalar_lea.hbm %s1, %s47
      %s49 = smul.u32 4, %s41
      %s50 = sshll.u32 [#allocation5], 4
      %s51 = int_to_ptr.vmem [resolvable:$true] %s50
      %s52 = sshll.u32 %s49, 4
      %56 = dma.hbm_to_vmem [thread:$0]  (%p46), %s48, %s52, %s51, [#allocation6], 64, 64, 4
    $region9: #{tpu_custom_call.1} parent=1 // pred_fallthru
      _
    // Predicated region
    $region10: #{tpu_custom_call.1} parent=1 // pred_check
      _
    $region11: #{tpu_custom_call.1} parent=1 // pred_check_branch
      %58 = sbr.rel (0) target = $region13
    $region12: #{tpu_custom_call.1} parent=1 // pred_region
      %59 = dma.done [#allocation3], 128
    $region13: #{tpu_custom_call.1} parent=1 // pred_fallthru
      _
    // Predicated region
    $region14: #{tpu_custom_call.1} parent=1 // pred_check
      _
    $region15: #{tpu_custom_call.1} parent=1 // pred_check_branch
      %61 = sbr.rel (0) target = $region17
    $region16: #{tpu_custom_call.1} parent=1 // pred_region
      %62 = dma.done [#allocation6], 128
    $region17: #{tpu_custom_call.1} parent=1 // pred_fallthru
      _
    %s63 = sadd.s32 0, 0
    %p64 = scmp.lt.s32.totalorder %s63, 0
    %s65 = scalar_select %p64, %s63, 0
    %s66 = smul.u32 2, %s65
    %s67 = ssub.s32 1, %s66
    %s68 = smul.u32 64, %s67
    %s69 = sadd.s32 0, 0
    %p70 = scmp.lt.s32.totalorder %s69, 0
    %s71 = scalar_select %p70, %s69, 0
    %s72 = smul.u32 2, %s71
    %s73 = ssub.s32 1, %s72
    %s74 = smul.u32 64, %s73
    %p75 = scmp.eq.s32.totalorder 0, 0
    // Predicated region
    $region18: #{tpu_custom_call.1} parent=1 // pred_check
      %p76 = pneg %p75
    $region19: #{tpu_custom_call.1} parent=1 // pred_check_branch
      %78 = sbr.rel (%p76) target = $region21
    $region20: #{tpu_custom_call.1} parent=1 // pred_region
      %79 = vst [vmem:[#allocation7] sm:$0xff] 0.0
      %80 = vst [vmem:[#allocation8] sm:$0xff] 0
    $region21: #{tpu_custom_call.1} parent=1 // pred_fallthru
      _
    %s81 = sadd.s32 0, 0
    %s82 = smul.u32 %s81, 8
    %p83 = scmp.lt.s32.totalorder %s81, 1
    %s84 = sadd.s32 %s82, 8
    %p85 = scmp.le.s32.totalorder %s84, 4
    %p86 = pnand %p83, %p85
    %p87 = pneg %p86
    // Predicated region
    $region22: #{tpu_custom_call.1} parent=1 // pred_check
      _
    $region23: #{tpu_custom_call.1} parent=1 // pred_check_branch
      %89 = sbr.rel (%p86) target = $region25
    $region24: #{tpu_custom_call.1} parent=1 // pred_region
      %v90 = vld [vmem:[#allocation5] sm:$0xff]
      %v91 = vld [vmem:[#allocation2] sm:$0xff]
      %vm92 = vcmp.gt.f32.partialorder %v90, 0.0
      %v93 = vsub.f32 %v90, %v91
      %v94 = vsel %vm92, %v93, 0.0
      %v95 = vmul.f32 %v94, %v94
      %v96 = vadd.f32 %v95, 0.0
      %v97 = vadd.f32 %v96, 0.0
      %v98 = vsel %vm92, 1, 0
      %v99 = vld [vmem:[#allocation7] sm:$0xff]
      %v100 = vadd.f32 %v99, %v97
      %101 = vst [vmem:[#allocation7] sm:$0xff] %v100
      %v102 = vld [vmem:[#allocation8] sm:$0xff]
      %v103 = vadd.s32 %v102, %v98
      %104 = vst [vmem:[#allocation8] sm:$0xff] %v103
    $region25: #{tpu_custom_call.1} parent=1 // pred_fallthru
      _
    %p105 = scmp.gt.s32.totalorder %s84, 4
    %p106 = pnand %p83, %p105
    %p107 = pneg %p106
    // Predicated region
    $region26: #{tpu_custom_call.1} parent=1 // pred_check
      _
    $region27: #{tpu_custom_call.1} parent=1 // pred_check_branch
      %109 = sbr.rel (%p106) target = $region29
    $region28: #{tpu_custom_call.1} parent=1 // pred_region
      %v110 = vld [vmem:[#allocation5] sm:$0xff]
      %v111 = vld [vmem:[#allocation2] sm:$0xff]
      %vm112 = vcmp.gt.f32.partialorder %v110, 0.0
      %v113 = vlaneseq
      %v114 = vshrl.u32 %v113, 7
      %v115 = vstv %s82
      %v116 = vadd.s32 %v114, %v115
      %v117 = vstv 0
      %v118 = vadd.s32 %v116, %v117
      %vm119 = vcmp.lt.s32.totalorder %v118, 4
      %vm120 = vmand %vm112, %vm119
      %v121 = vsub.f32 %v110, %v111
      %v122 = vsel %vm120, %v121, 0.0
      %v123 = vmul.f32 %v122, %v122
      %v124 = vadd.f32 %v123, 0.0
      %v125 = vadd.f32 %v124, 0.0
      %v126 = vsel %vm120, 1, 0
      %v127 = vld [vmem:[#allocation7] sm:$0xff]
      %v128 = vadd.f32 %v127, %v125
      %129 = vst [vmem:[#allocation7] sm:$0xff] %v128
      %v130 = vld [vmem:[#allocation8] sm:$0xff]
      %v131 = vadd.s32 %v130, %v126
      %132 = vst [vmem:[#allocation8] sm:$0xff] %v131
    $region29: #{tpu_custom_call.1} parent=1 // pred_fallthru
      _
    // Predicated region
    $region30: #{tpu_custom_call.1} parent=1 // pred_check
      _
    $region31: #{tpu_custom_call.1} parent=1 // pred_check_branch
      %134 = sbr.rel (0) target = $region33
    $region32: #{tpu_custom_call.1} parent=1 // pred_region
      %s136 = ssub.s32 128, 128
      %137 = vsyncadd [#allocation4], %s136
      %s139 = sshll.u32 [#allocation7], 4
      %s140 = int_to_ptr.vmem [resolvable:$true] %s139
      %142 = dma.vmem_to_hbm [thread:$0]  %s140, 128, %s2, [#allocation4]
    $region33: #{tpu_custom_call.1} parent=1 // pred_fallthru
      _
    // Predicated region
    $region34: #{tpu_custom_call.1} parent=1 // pred_check
      _
    $region35: #{tpu_custom_call.1} parent=1 // pred_check_branch
      %144 = sbr.rel (0) target = $region37
    $region36: #{tpu_custom_call.1} parent=1 // pred_region
      %s146 = ssub.s32 128, 128
      %147 = vsyncadd [#allocation9], %s146
      %s149 = sshll.u32 [#allocation8], 4
      %s150 = int_to_ptr.vmem [resolvable:$true] %s149
      %152 = dma.vmem_to_hbm [thread:$0]  %s150, 128, %s3, [#allocation9]
    $region37: #{tpu_custom_call.1} parent=1 // pred_fallthru
      _
    // Predicated region
    $region38: #{tpu_custom_call.1} parent=1 // pred_check
      _
    $region39: #{tpu_custom_call.1} parent=1 // pred_check_branch
      %154 = sbr.rel (0) target = $region41
    $region40: #{tpu_custom_call.1} parent=1 // pred_region
      %155 = dma.done [#allocation4], 128
    $region41: #{tpu_custom_call.1} parent=1 // pred_fallthru
      _
    // Predicated region
    $region42: #{tpu_custom_call.1} parent=1 // pred_check
      _
    $region43: #{tpu_custom_call.1} parent=1 // pred_check_branch
      %157 = sbr.rel (0) target = $region45
    $region44: #{tpu_custom_call.1} parent=1 // pred_region
      %158 = dma.done [#allocation9], 128
    $region45: #{tpu_custom_call.1} parent=1 // pred_fallthru
      _
    %159 = vsyncpa [#allocation3], 1
    %160 = vsyncpa [#allocation6], 1
    %161 = vsyncpa [#allocation4], 1
    %162 = vsyncpa [#allocation9], 1

</llo_original>
